<compile_context>
chip_gen: v7x
topology: tpu7x:2x2x1
jax: 0.10.0
libtpu: 0.0.40
codegen_flags: <defaults>
</compile_context>

<pallas_src>
import functools

import jax
import jax.numpy as jnp
from jax.experimental import pallas as pl
from jax.experimental.pallas import tpu as pltpu


# --------------------------------- kernels ---------------------------------- #

def _hsfm_fused_kernel(x_ref, y_ref, wl_ref, bl_ref, wg_ref, bg_ref, o_ref, *,
                       inv_hw):
    """Per-block (NB whole images) fused HSFM: mean + both branches + blend.

    Block shapes:
      x/y/o : (NB, HWp, GC)    lane-dense packed images
      wl    : (GC, GC)         block-diagonal folded local conv+BN weight
      bl    : (1, GC)          folded local bias (f32)
      wg    : (GC, GC)         group-REPLICATED folded global conv+BN weight
                               (sums partial group means and broadcasts result)
      bg    : (1, GC)          folded global bias (f32)
    """
    x = x_ref[...].astype(jnp.float32)            # single upcast
    y = y_ref[...].astype(jnp.float32)
    xa = x + y                                    # (NB, HWp, GC) f32

    nb, hwp, gc = xa.shape
    mxu_dt = wl_ref.dtype

    # ---- global branch: per-image channel means, done inside the kernel ----
    # sum over packed rows gives per-group partial sums; dividing by the TRUE
    # H*W and multiplying by the group-replicated weight yields the full-image
    # global-branch activation, already broadcast to every packed group.
    mean = jnp.sum(xa, axis=1) * inv_hw                               # (NB, GC)
    xg = jnp.dot(mean.astype(mxu_dt), wg_ref[...],
                 preferred_element_type=jnp.float32) + bg_ref[...]    # (NB, GC)
    xg = jnp.maximum(xg, 0.0)

    # ---- local branch: block-diagonal 1x1 conv (folded BN) + ReLU on MXU ----
    xa2 = xa.reshape(nb * hwp, gc).astype(mxu_dt)
    xl = jnp.dot(xa2, wl_ref[...], preferred_element_type=jnp.float32)
    xl = xl.reshape(nb, hwp, gc) + bl_ref[...]
    xl = jnp.maximum(xl, 0.0)                                         # f32

    # sigmoid(z) == 0.5 * tanh(0.5*z) + 0.5  -> one EUP op per element
    z = xl + xg[:, None, :]
    wei = 0.5 * jnp.tanh(0.5 * z) + 0.5

    # out = x*wei + y*(1-wei) == y + (x - y)*wei ; single downcast at the store
    o_ref[...] = (y + (x - y) * wei).astype(o_ref.dtype)


def _hsfm_streamed_kernel(x_ref, y_ref, xg_ref, wl_ref, bl_ref, o_ref):
    """Streamed fallback: xg precomputed per image, spatial dim tiled."""
    x = x_ref[0].astype(jnp.float32)              # (TILE, GC)
    y = y_ref[0].astype(jnp.float32)
    xa = x + y

    xl = jnp.dot(xa.astype(wl_ref.dtype), wl_ref[...],
                 preferred_element_type=jnp.float32) + bl_ref[...]
    xl = jnp.maximum(xl, 0.0)

    z = xl + xg_ref[0]                            # (TILE,GC) + (1,GC) broadcast
    wei = 0.5 * jnp.tanh(0.5 * z) + 0.5

    o_ref[0] = (y + (x - y) * wei).astype(o_ref.dtype)


# ------------------------------ host helpers -------------------------------- #

def _vmem_budget_bytes():
    """~70% of physical VMEM; conservative (v7x-sized) default if query fails."""
    cap = None
    try:
        info = pltpu.get_tpu_info()
        cap = getattr(info, "vmem_capacity_bytes", None)
    except Exception:
        cap = None
    if not cap:
        cap = 64 * 1024 * 1024       # v7x per-TC physical VMEM (smallest gen)
    return int(0.70 * int(cap))


def _pick_group(c, hw, lane=128, max_group=16):
    """Smallest G with (G*C) % 128 == 0 and HW % G == 0 (lane-dense repack)."""
    for g in range(1, max_group + 1):
        if (g * c) % lane == 0 and hw % g == 0:
            return g
    # TODO(synk): channel counts that cannot be packed fall back to a
    # lane-sparse (masked-store) layout; zero-padding C would fix this.
    return 1


def _block_diag(w, g):
    """(C,C) -> (g*C, g*C) block diagonal [W 0 ...; 0 W ...; ...]."""
    if g == 1:
        return w
    ci, co = w.shape
    big = jnp.zeros((g * ci, g * co), dtype=w.dtype)
    for i in range(g):
        big = big.at[i * ci:(i + 1) * ci, i * co:(i + 1) * co].set(w)
    return big


def _fused_vmem_need(nb, hwp, gc, io_itemsize, w_itemsize):
    io_slab = nb * hwp * gc * io_itemsize
    f32_slab = nb * hwp * gc * 4
    weights = 2 * (2 * gc * gc * w_itemsize + 2 * gc * 4)   # double-buffered
    # x/y/o double-buffered + ~6 live f32 intermediates + margin.
    return 6 * io_slab + 6 * f32_slab + weights + (4 << 20)


def _pick_images_per_block(n, hwp, gc, io_itemsize, w_itemsize, budget,
                           target_bytes):
    """Largest divisor NB of N that fits VMEM, keeps >=2 grid steps (megacore),
    stopping once each step streams >= target_bytes."""
    nb = 1
    for cand in range(1, n + 1):
        if n % cand:
            continue
        if cand > 1 and hwp % 8:
            break                      # avoid a relayout reshape in-kernel
        if _fused_vmem_need(cand, hwp, gc, io_itemsize, w_itemsize) > budget:
            break
        if cand > 1 and n // cand < 2:
            break                      # keep work for both v7x TensorCores
        nb = cand
        if 3 * cand * hwp * gc * io_itemsize >= target_bytes:
            break
    return nb


def _pick_tile_rows(hwp, gc, io_itemsize, budget, target_bytes):
    """Rows per streamed step so x+y+o stream ~target_bytes, bounded by VMEM."""
    per_row_stream = 3 * gc * io_itemsize
    rows_target = max(8, target_bytes // per_row_stream)
    per_row_vmem = 6 * gc * io_itemsize + 6 * gc * 4
    rows_vmem = max(8, (budget - (8 << 20)) // per_row_vmem)
    rows = int(min(rows_target, rows_vmem, hwp))
    if rows < hwp:
        rows = max(8, rows - (rows % 8))     # (8,128) alignment; cdiv grid below
    return rows


def fold_conv_bn(conv_w, conv_b, gamma, beta, mean, var, eps=1e-5):
    """Fold eval-mode BatchNorm into a 1x1 conv expressed as a (C_in, C_out) matmul.

    conv_w: (C_out, C_in) from PyTorch weight[:, :, 0, 0];
    returns W (C_in, C_out), bias (1, C_out)."""
    a = gamma / jnp.sqrt(var + eps)
    b = beta - mean * a
    w_mat = conv_w.T * a[None, :]
    bias = (conv_b * a + b)[None, :]
    return w_mat.astype(jnp.float32), bias.astype(jnp.float32)


# ------------------------------- entry point -------------------------------- #

def hsfm_pallas(x, y, wl, bl, wg, bg, *, group=None, force_streamed=False,
                force_bf16_matmul=False, step_bytes_target=8 << 20):
    """x, y: (N, HW, C) f32/bf16; wl/wg: (C, C) folded; bl/bg: (1, C) folded."""
    N, HW, C = x.shape
    out_dtype = x.dtype
    io_itemsize = jnp.dtype(x.dtype).itemsize
    # bf16 MXU operands when I/O is bf16; optionally force for v5e f32 inputs.
    mxu_dtype = jnp.bfloat16 if (force_bf16_matmul or x.dtype == jnp.bfloat16) \
        else jnp.float32
    w_itemsize = jnp.dtype(mxu_dtype).itemsize

    # ---- lane-dense repack: (N, HW, C) -> (N, HW/G, G*C), G*C % 128 == 0 ----
    G = _pick_group(C, HW) if group is None else group
    GC = G * C
    HWp = HW // G
    x_p = x.reshape(N, HWp, GC)
    y_p = y.reshape(N, HWp, GC)

    # Folded weights:
    #   wl_big : block-diagonal -> per-group 1x1 conv on the packed layout.
    #   wg_rep : every (g,g') block is wg -> multiplying the per-group partial
    #            means by it sums over groups AND broadcasts the result back.
    wl_big = _block_diag(wl, G).astype(mxu_dtype)              # (GC, GC)
    bl_big = jnp.tile(bl, (1, G)).astype(jnp.float32)          # (1, GC)
    wg_rep_f32 = jnp.tile(wg, (G, G)).astype(jnp.float32)      # (GC, GC)
    bg_big = jnp.tile(bg, (1, G)).astype(jnp.float32)          # (1, GC)

    budget = _vmem_budget_bytes()

    fused_ok = (not force_streamed) and (
        _fused_vmem_need(1, HWp, GC, io_itemsize, w_itemsize) <= budget)

    if fused_ok:
        # ---------------- fused 3-pass path (no mean pre-pass) --------------- #
        nb = _pick_images_per_block(N, HWp, GC, io_itemsize, w_itemsize, budget,
                                    step_bytes_target)
        n_blocks = N // nb
        need = _fused_vmem_need(nb, HWp, GC, io_itemsize, w_itemsize)
        vmem_limit = int(min(budget, need + (4 << 20)))

        cost = pl.CostEstimate(
            flops=2 * N * HWp * GC * GC + 10 * N * HWp * GC,
            transcendentals=N * HWp * GC,
            bytes_accessed=3 * N * HWp * GC * io_itemsize
                           + 2 * GC * GC * w_itemsize,
        )
        grid_spec = pltpu.PrefetchScalarGridSpec(
            num_scalar_prefetch=0,
            grid=(n_blocks,),
            in_specs=[
                pl.BlockSpec((nb, HWp, GC), lambda b: (b, 0, 0)),   # x
                pl.BlockSpec((nb, HWp, GC), lambda b: (b, 0, 0)),   # y
                pl.BlockSpec((GC, GC), lambda b: (0, 0)),           # wl block-diag
                pl.BlockSpec((1, GC), lambda b: (0, 0)),            # bl
                pl.BlockSpec((GC, GC), lambda b: (0, 0)),           # wg replicated
                pl.BlockSpec((1, GC), lambda b: (0, 0)),            # bg
            ],
            out_specs=pl.BlockSpec((nb, HWp, GC), lambda b: (b, 0, 0)),
        )
        out_p = pl.pallas_call(
            functools.partial(_hsfm_fused_kernel, inv_hw=1.0 / HW),
            out_shape=jax.ShapeDtypeStruct((N, HWp, GC), out_dtype),
            grid_spec=grid_spec,
            compiler_params=pltpu.CompilerParams(
                dimension_semantics=("parallel",),
                vmem_limit_bytes=vmem_limit),
            cost_estimate=cost,
        )(x_p, y_p, wl_big, bl_big, wg_rep_f32.astype(mxu_dtype), bg_big)
        return out_p.reshape(N, HW, C)

    # ------------- streamed fallback (image does not fit in VMEM) ----------- #
    # Tiny XLA pre-pass for the global branch (re-reads x,y from HBM).
    colmean = (jnp.sum(x_p.astype(jnp.float32), axis=1)
               + jnp.sum(y_p.astype(jnp.float32), axis=1)) * (1.0 / HW)  # (N,GC)
    xg = jnp.maximum(colmean @ wg_rep_f32 + bg_big, 0.0)                 # (N,GC)
    xg_p = xg.reshape(N, 1, GC).astype(jnp.float32)

    TILE = _pick_tile_rows(HWp, GC, io_itemsize, budget, step_bytes_target)
    tiles_per_img = pl.cdiv(HWp, TILE)
    grid = (N * tiles_per_img,)            # flat 1-D parallel axis (megacore)

    need = (6 * TILE * GC * io_itemsize + 6 * TILE * GC * 4
            + 2 * (2 * GC * GC * w_itemsize + 2 * GC * 4) + (4 << 20))
    vmem_limit = int(min(budget, need + (4 << 20)))

    cost = pl.CostEstimate(
        flops=2 * N * HWp * GC * GC + 10 * N * HWp * GC,
        transcendentals=N * HWp * GC,
        bytes_accessed=3 * N * HWp * GC * io_itemsize + GC * GC * w_itemsize,
    )
    grid_spec = pltpu.PrefetchScalarGridSpec(
        num_scalar_prefetch=0,
        grid=grid,
        in_specs=[
            pl.BlockSpec((1, TILE, GC),
                         lambda i: (i // tiles_per_img, i % tiles_per_img, 0)),
            pl.BlockSpec((1, TILE, GC),
                         lambda i: (i // tiles_per_img, i % tiles_per_img, 0)),
            pl.BlockSpec((1, 1, GC), lambda i: (i // tiles_per_img, 0, 0)),
            pl.BlockSpec((GC, GC), lambda i: (0, 0)),
            pl.BlockSpec((1, GC), lambda i: (0, 0)),
        ],
        out_specs=pl.BlockSpec((1, TILE, GC),
                               lambda i: (i // tiles_per_img, i % tiles_per_img, 0)),
    )
    out_p = pl.pallas_call(
        _hsfm_streamed_kernel,
        out_shape=jax.ShapeDtypeStruct((N, HWp, GC), out_dtype),
        grid_spec=grid_spec,
        compiler_params=pltpu.CompilerParams(
            dimension_semantics=("parallel",),
            vmem_limit_bytes=vmem_limit),
        cost_estimate=cost,
    )(x_p, y_p, xg_p, wl_big, bl_big)
    return out_p.reshape(N, HW, C)


# ------------------------------- reference ---------------------------------- #

def hsfm_reference(x, y, wl, bl, wg, bg):
    xf = x.astype(jnp.float32)
    yf = y.astype(jnp.float32)
    xa = xf + yf
    xl = jnp.maximum(jnp.einsum("nsc,cd->nsd", xa, wl) + bl[None], 0.0)
    avg = jnp.mean(xa, axis=1, keepdims=True)
    xg = jnp.maximum(jnp.einsum("nsc,cd->nsd", avg, wg) + bg[None], 0.0)
    wei = jax.nn.sigmoid(xl + xg)
    return xf * wei + yf * (1.0 - wei)


# ----------------------------------- main ------------------------------------ #

if __name__ == "__main__":
    channels = 64          # module default
    N, H, W = 2, 16, 16
    HW = H * W

    key = jax.random.PRNGKey(0)
    keys = jax.random.split(key, 12)

    # Inputs in NCHW (PyTorch convention), moved to (N, HW, C) for the kernel.
    x_nchw = jax.random.normal(keys[0], (N, channels, H, W), dtype=jnp.float32)
    y_nchw = jax.random.normal(keys[1], (N, channels, H, W), dtype=jnp.float32)
    x = jnp.transpose(x_nchw, (0, 2, 3, 1)).reshape(N, HW, channels)
    y = jnp.transpose(y_nchw, (0, 2, 3, 1)).reshape(N, HW, channels)

    # Deterministic synthetic parameters (shapes from the module __init__).
    # local_att: Conv2d(C,C,1) + BatchNorm2d(C)
    wl_conv = jax.random.normal(keys[2], (channels, channels), dtype=jnp.float32) * 0.05
    bl_conv = jax.random.normal(keys[3], (channels,), dtype=jnp.float32) * 0.05
    gl = 1.0 + 0.1 * jax.random.normal(keys[4], (channels,), dtype=jnp.float32)
    bl_bn = 0.1 * jax.random.normal(keys[5], (channels,), dtype=jnp.float32)
    ml = 0.1 * jax.random.normal(keys[6], (channels,), dtype=jnp.float32)
    vl = jnp.abs(jax.random.normal(keys[7], (channels,), dtype=jnp.float32)) + 0.5

    # global_att: AdaptiveAvgPool2d(1) + Conv2d(C,C,1) + BatchNorm2d(C)
    wg_conv = jax.random.normal(keys[8], (channels, channels), dtype=jnp.float32) * 0.05
    bg_conv = jax.random.normal(keys[9], (channels,), dtype=jnp.float32) * 0.05
    gg = 1.0 + 0.1 * jax.random.normal(keys[10], (channels,), dtype=jnp.float32)
    bg_bn = 0.1 * jax.random.normal(keys[11], (channels,), dtype=jnp.float32)
    mg = jnp.zeros((channels,), dtype=jnp.float32)
    vg = jnp.ones((channels,), dtype=jnp.float32)

    # Fold eval-mode BN into the 1x1 convs (plain-JAX glue).
    wl, bl = fold_conv_bn(wl_conv, bl_conv, gl, bl_bn, ml, vl)
    wg, bg = fold_conv_bn(wg_conv, bg_conv, gg, bg_bn, mg, vg)

    ref = hsfm_reference(x, y, wl, bl, wg, bg)

    # 1) fused f32 path (default): 3 HBM passes, in-kernel global branch.
    out = jax.block_until_ready(hsfm_pallas(x, y, wl, bl, wg, bg))
    assert jnp.allclose(out, ref, atol=5e-4, rtol=5e-4), \
        "Pallas fused f32 output mismatch vs JAX reference"

    # 2) streamed fallback path (forced) — exercised for coverage.
    out_s = jax.block_until_ready(hsfm_pallas(x, y, wl, bl, wg, bg,
                                              force_streamed=True))
    assert jnp.allclose(out_s, ref, atol=5e-4, rtol=5e-4), \
        "Pallas streamed f32 output mismatch vs JAX reference"

    # 3) bf16 I/O path (halves HBM traffic of this memory-bound op).
    x16 = x.astype(jnp.bfloat16)
    y16 = y.astype(jnp.bfloat16)
    out16 = jax.block_until_ready(hsfm_pallas(x16, y16, wl, bl, wg, bg))
    ref16 = hsfm_reference(x16, y16, wl, bl, wg, bg)
    max_err = float(jnp.max(jnp.abs(out16.astype(jnp.float32) - ref16)))
    assert max_err < 0.1, f"Pallas bf16 output drift too large: {max_err}"

    print("KERNEL_OK")
</pallas_src>

<mosaic_0001>
module attributes {stable_mosaic.version = 11 : i64} {
  func.func @_hsfm_fused_kernel(%arg0: i32, %arg1: memref<1x128x128xf32, #tpu.memory_space<vmem>>, %arg2: memref<1x128x128xf32, #tpu.memory_space<vmem>>, %arg3: memref<128x128xf32, #tpu.memory_space<vmem>>, %arg4: memref<1x128xf32, #tpu.memory_space<vmem>>, %arg5: memref<128x128xf32, #tpu.memory_space<vmem>>, %arg6: memref<1x128xf32, #tpu.memory_space<vmem>>, %arg7: memref<1x128x128xf32, #tpu.memory_space<vmem>>) attributes {dimension_semantics = [#tpu.dimension_semantics<parallel>], iteration_bounds = array<i64: 2>, scalar_prefetch = 0 : i64, scratch_operands = 0 : i64, tpu.core_type = #tpu.core_type<tc>, window_params = [{transform_indices = @transform_0, window_bounds = array<i64: 1, 128, 128>}, {transform_indices = @transform_1, window_bounds = array<i64: 1, 128, 128>}, {pipeline_mode = #tpu.pipeline_mode<synchronous>, transform_indices = @transform_2, window_bounds = array<i64: 128, 128>}, {pipeline_mode = #tpu.pipeline_mode<synchronous>, transform_indices = @transform_3, window_bounds = array<i64: 1, 128>}, {pipeline_mode = #tpu.pipeline_mode<synchronous>, transform_indices = @transform_4, window_bounds = array<i64: 128, 128>}, {pipeline_mode = #tpu.pipeline_mode<synchronous>, transform_indices = @transform_5, window_bounds = array<i64: 1, 128>}, {transform_indices = @transform_6, window_bounds = array<i64: 1, 128, 128>}]} {
    %c0 = arith.constant 0 : index
    %c0_0 = arith.constant 0 : index
    %c0_1 = arith.constant 0 : index
    %0 = vector.load %arg1[%c0, %c0_0, %c0_1] : memref<1x128x128xf32, #tpu.memory_space<vmem>>, vector<1x128x128xf32>
    %c0_2 = arith.constant 0 : index
    %c0_3 = arith.constant 0 : index
    %c0_4 = arith.constant 0 : index
    %1 = vector.load %arg2[%c0_2, %c0_3, %c0_4] : memref<1x128x128xf32, #tpu.memory_space<vmem>>, vector<1x128x128xf32>
    %2 = arith.addf %0, %1 : vector<1x128x128xf32>
    %cst = arith.constant dense<0.000000e+00> : vector<1x128xf32>
    %3 = vector.multi_reduction <add>, %2, %cst [1] : vector<1x128x128xf32> to vector<1x128xf32>
    %cst_5 = arith.constant 3.906250e-03 : f32
    %4 = vector.broadcast %cst_5 : f32 to vector<1x128xf32>
    %5 = arith.mulf %3, %4 : vector<1x128xf32>
    %c0_6 = arith.constant 0 : index
    %c0_7 = arith.constant 0 : index
    %6 = vector.load %arg5[%c0_6, %c0_7] : memref<128x128xf32, #tpu.memory_space<vmem>>, vector<128x128xf32>
    %cst_8 = arith.constant dense<0.000000e+00> : vector<1x128xf32>
    %7 = tpu.matmul %5, %6, %cst_8 {dimension_numbers = #tpu.dot_dimension_numbers<[1], [0], [0], [1], [0, 0, 1, 1], [], []>} : vector<1x128xf32>, vector<128x128xf32>, vector<1x128xf32> -> vector<1x128xf32>
    %c0_9 = arith.constant 0 : index
    %c0_10 = arith.constant 0 : index
    %8 = vector.load %arg6[%c0_9, %c0_10] : memref<1x128xf32, #tpu.memory_space<vmem>>, vector<1x128xf32>
    %9 = arith.addf %7, %8 : vector<1x128xf32>
    %cst_11 = arith.constant 0.000000e+00 : f32
    %10 = vector.broadcast %cst_11 : f32 to vector<1x128xf32>
    %11 = arith.maximumf %9, %10 : vector<1x128xf32>
    %12 = vector.shape_cast %2 : vector<1x128x128xf32> to vector<128x128xf32>
    %c0_12 = arith.constant 0 : index
    %c0_13 = arith.constant 0 : index
    %13 = vector.load %arg3[%c0_12, %c0_13] : memref<128x128xf32, #tpu.memory_space<vmem>>, vector<128x128xf32>
    %cst_14 = arith.constant dense<0.000000e+00> : vector<128x128xf32>
    %14 = tpu.matmul %12, %13, %cst_14 {dimension_numbers = #tpu.dot_dimension_numbers<[1], [0], [0], [1], [0, 0, 1, 1], [], []>} : vector<128x128xf32>, vector<128x128xf32>, vector<128x128xf32> -> vector<128x128xf32>
    %15 = vector.shape_cast %14 : vector<128x128xf32> to vector<1x128x128xf32>
    %c0_15 = arith.constant 0 : index
    %c0_16 = arith.constant 0 : index
    %16 = vector.load %arg4[%c0_15, %c0_16] : memref<1x128xf32, #tpu.memory_space<vmem>>, vector<1x128xf32>
    %17 = vector.shape_cast %16 : vector<1x128xf32> to vector<1x1x128xf32>
    %18 = vector.broadcast %17 : vector<1x1x128xf32> to vector<1x128x128xf32>
    %19 = arith.addf %15, %18 : vector<1x128x128xf32>
    %cst_17 = arith.constant 0.000000e+00 : f32
    %20 = vector.broadcast %cst_17 : f32 to vector<1x128x128xf32>
    %21 = arith.maximumf %19, %20 : vector<1x128x128xf32>
    %22 = vector.shape_cast %11 : vector<1x128xf32> to vector<1x1x128xf32>
    %23 = vector.broadcast %22 : vector<1x1x128xf32> to vector<1x128x128xf32>
    %24 = arith.addf %21, %23 : vector<1x128x128xf32>
    %cst_18 = arith.constant 5.000000e-01 : f32
    %25 = vector.broadcast %cst_18 : f32 to vector<1x128x128xf32>
    %26 = arith.mulf %25, %24 : vector<1x128x128xf32>
    %27 = math.tanh %26 : vector<1x128x128xf32>
    %cst_19 = arith.constant 5.000000e-01 : f32
    %28 = vector.broadcast %cst_19 : f32 to vector<1x128x128xf32>
    %29 = arith.mulf %28, %27 : vector<1x128x128xf32>
    %cst_20 = arith.constant 5.000000e-01 : f32
    %30 = vector.broadcast %cst_20 : f32 to vector<1x128x128xf32>
    %31 = arith.addf %29, %30 : vector<1x128x128xf32>
    %32 = arith.subf %0, %1 : vector<1x128x128xf32>
    %33 = arith.mulf %32, %31 : vector<1x128x128xf32>
    %34 = arith.addf %1, %33 : vector<1x128x128xf32>
    %c0_21 = arith.constant 0 : index
    %c0_22 = arith.constant 0 : index
    %c0_23 = arith.constant 0 : index
    %35 = vector.load %arg7[%c0_21, %c0_22, %c0_23] : memref<1x128x128xf32, #tpu.memory_space<vmem>>, vector<1x128x128xf32>
    tpu.vector_store %arg7[%c0_21, %c0_22, %c0_23], %34 {strides = array<i32>} : memref<1x128x128xf32, #tpu.memory_space<vmem>>, vector<1x128x128xf32>,
    return
  }
  func.func @transform_0(%arg0: i32) -> (i32, i32, i32) {
    %c0_i32 = arith.constant 0 : i32
    %c0_i32_0 = arith.constant 0 : i32
    %c0_i32_1 = arith.constant 0 : i32
    return %arg0, %c0_i32, %c0_i32_0 : i32, i32, i32
  }
  func.func @transform_1(%arg0: i32) -> (i32, i32, i32) {
    %c0_i32 = arith.constant 0 : i32
    %c0_i32_0 = arith.constant 0 : i32
    %c0_i32_1 = arith.constant 0 : i32
    return %arg0, %c0_i32, %c0_i32_0 : i32, i32, i32
  }
  func.func @transform_2(%arg0: i32) -> (i32, i32) {
    %c0_i32 = arith.constant 0 : i32
    %c0_i32_0 = arith.constant 0 : i32
    %c0_i32_1 = arith.constant 0 : i32
    return %c0_i32, %c0_i32_0 : i32, i32
  }
  func.func @transform_3(%arg0: i32) -> (i32, i32) {
    %c0_i32 = arith.constant 0 : i32
    %c0_i32_0 = arith.constant 0 : i32
    %c0_i32_1 = arith.constant 0 : i32
    return %c0_i32, %c0_i32_0 : i32, i32
  }
  func.func @transform_4(%arg0: i32) -> (i32, i32) {
    %c0_i32 = arith.constant 0 : i32
    %c0_i32_0 = arith.constant 0 : i32
    %c0_i32_1 = arith.constant 0 : i32
    return %c0_i32, %c0_i32_0 : i32, i32
  }
  func.func @transform_5(%arg0: i32) -> (i32, i32) {
    %c0_i32 = arith.constant 0 : i32
    %c0_i32_0 = arith.constant 0 : i32
    %c0_i32_1 = arith.constant 0 : i32
    return %c0_i32, %c0_i32_0 : i32, i32
  }
  func.func @transform_6(%arg0: i32) -> (i32, i32, i32) {
    %c0_i32 = arith.constant 0 : i32
    %c0_i32_0 = arith.constant 0 : i32
    %c0_i32_1 = arith.constant 0 : i32
    return %arg0, %c0_i32, %c0_i32_0 : i32, i32, i32
  }
}

</mosaic_0001>

<llo_original>
// kernel: tpu_custom_call.1
$region0: #{tpu_custom_call.1}
  #allocation0 [shape = 'u32[]', space=smem, size = 0x4, offset = 0x4, fixed_abs, tag = 'smem constant byte address 0x4 - core index']
  #allocation1 [shape = 'u32[144,128]{1,0:T(1,128)}', space=vmem, size = 0x12000, scoped, tag = 'internal scratch']
  %s0 = inlined_call_operand.hbm [shape: f32[2,128,128], index: 0, kind: input, shape index: {}]
  %s1 = inlined_call_operand.hbm [shape: f32[2,128,128], index: 1, kind: input, shape index: {}]
  %s2 = inlined_call_operand.hbm [shape: f32[128,128], index: 2, kind: input, shape index: {}]
  %s3 = inlined_call_operand.vmem [shape: f32[1,128], index: 3, kind: input, shape index: {}]
  %s4 = inlined_call_operand.hbm [shape: f32[128,128], index: 4, kind: input, shape index: {}]
  %s5 = inlined_call_operand.vmem [shape: f32[1,128], index: 5, kind: input, shape index: {}]
  %s6 = inlined_call_operand.hbm [shape: f32[2,128,128], index: 6, kind: output, shape index: {}]
  %s7 = sld [smem:[#allocation0]]
  $region73: #{tpu_custom_call.1} parent=0
    _
  %s9 = ssub.s32 1, %s7
  %s10 = scalar_select 0, %s9, %s7
  $region1: #{tpu_custom_call.1} parent=0
    #allocation2 [shape = 'u8[131072]{0}', space=vmem, size = 0x20000, scoped, tag = 'input window, operand 0']
    #allocation3 [shape = 's32[2]{0}', space=sflag, size = 0x8, scoped, tag = 'scoped memory for tpu_custom_call.1']
    #allocation4 [shape = 's32[2]{0}', space=sflag, size = 0x8, scoped, tag = 'scoped memory for tpu_custom_call.1']
    #allocation5 [shape = 'u8[131072]{0}', space=vmem, size = 0x20000, scoped, tag = 'input window, operand 1']
    #allocation6 [shape = 's32[2]{0}', space=sflag, size = 0x8, scoped, tag = 'scoped memory for tpu_custom_call.1']
    #allocation7 [shape = 'u8[65536]{0}', space=vmem, size = 0x10000, scoped, tag = 'input window, operand 2, single buffered']
    #allocation8 [shape = 'u8[65536]{0}', space=vmem, size = 0x10000, scoped, tag = 'input window, operand 4, single buffered']
    #allocation9 [shape = 's32[1]{0}', space=sflag, size = 0x4, scoped, tag = 'scoped memory for tpu_custom_call.1']
    #allocation10 [shape = 'u8[131072]{0}', space=vmem, size = 0x20000, scoped, tag = 'output window, operand 0']
    %11 = vsyncpa [#allocation3], 0
    %s12 = scalar_lea.sflag [#allocation3], 1
    %13 = vsyncpa %s12, 0
    %14 = vsyncpa [#allocation6], 0
    %s15 = scalar_lea.sflag [#allocation6], 1
    %16 = vsyncpa %s15, 0
    %17 = vsyncpa [#allocation9], 0
    %18 = vsyncpa [#allocation4], 0
    %s19 = scalar_lea.sflag [#allocation4], 1
    %20 = vsyncpa %s19, 0
    loop: start=0, step=1, limit=4
    $region2: #{tpu_custom_call.1} parent=1 // loop_pre_header
      _
    $region3: #{tpu_custom_call.1} parent=1 // loop_header
      %s22 = sphi 0, %s26
      %p23 = scmp.ge.s32.totalorder %s22, 4
      %s32 = sphi 0, %s34
      %s35 = sphi 0, %s32
      %s36 = sphi 0, %s35
      %s52 = sphi 0, %s36
      %s58 = sphi 0, %s60
      %s61 = sphi 0, %s58
      %s62 = sphi 0, %s61
      %s78 = sphi 0, %s62
      %s82 = sphi 0, %s82
      %s84 = sphi 0, %s82
      %s85 = sphi 0, %s84
      %s99 = sphi 0, %s85
      %s103 = sphi 0, %s103
      %s105 = sphi 0, %s103
      %s106 = sphi 0, %s105
      %s120 = sphi 0, %s106
      %s124 = sphi 0, %s124
      %s126 = sphi 0, %s124
      %s127 = sphi 0, %s126
      %s141 = sphi 0, %s127
      %s145 = sphi 0, %s145
      %s147 = sphi 0, %s145
      %s148 = sphi 0, %s147
      %s162 = sphi 0, %s148
      %s168 = sphi 0, %s170
      %s171 = sphi 0, %s168
      %s172 = sphi 0, %s171
      %s188 = sphi 0, %s172
    $region4: #{tpu_custom_call.1} parent=1 // loop_header_branch
      %25 = sbr.rel (%p23) target = $region8
    $region5: #{tpu_custom_call.1} parent=1 // loop_body
      %s27 = ssub.s32 %s22, 1
      %s28 = ssub.s32 %s22, 2
      %s29 = sadd.s32 %s22, 1
      %s30 = ssub.s32 %s22, %s29
      %p31 = scmp.eq.s32.totalorder %s30, 0
      %s33 = sadd.s32 %s32, 1
      %s34 = scalar_select %p31, %s32, %s33
      %p37 = pneg %p31
      %p38 = scmp.eq.s32.totalorder %s22, 1
      %p39 = por %p37, %p38
      %p40 = scmp.ne.s32.totalorder %s32, %s35
      %p41 = scmp.eq.s32.totalorder %s22, 0
      %p42 = por %p40, %p41
      %p43 = scmp.ne.s32.totalorder %s32, %s35
      %p44 = scmp.eq.s32.totalorder %s27, 1
      %p45 = por %p43, %p44
      %p46 = scmp.ne.s32.totalorder %s35, %s36
      %p47 = scmp.eq.s32.totalorder %s27, 0
      %p48 = por %p46, %p47
      %p49 = scmp.ne.s32.totalorder %s35, %s36
      %p50 = scmp.eq.s32.totalorder %s28, 1
      %p51 = por %p49, %p50
      %p53 = scmp.ne.s32.totalorder %s36, %s52
      %p54 = scmp.eq.s32.totalorder %s28, 0
      %p55 = por %p53, %p54
      %s56 = ssub.s32 %s22, %s29
      %p57 = scmp.eq.s32.totalorder %s56, 0
      %s59 = sadd.s32 %s58, 1
      %s60 = scalar_select %p57, %s58, %s59
      %p63 = pneg %p57
      %p64 = scmp.eq.s32.totalorder %s22, 1
      %p65 = por %p63, %p64
      %p66 = scmp.ne.s32.totalorder %s58, %s61
      %p67 = scmp.eq.s32.totalorder %s22, 0
      %p68 = por %p66, %p67
      %p69 = scmp.ne.s32.totalorder %s58, %s61
      %p70 = scmp.eq.s32.totalorder %s27, 1
      %p71 = por %p69, %p70
      %p72 = scmp.ne.s32.totalorder %s61, %s62
      %p73 = scmp.eq.s32.totalorder %s27, 0
      %p74 = por %p72, %p73
      %p75 = scmp.ne.s32.totalorder %s61, %s62
      %p76 = scmp.eq.s32.totalorder %s28, 1
      %p77 = por %p75, %p76
      %p79 = scmp.ne.s32.totalorder %s62, %s78
      %p80 = scmp.eq.s32.totalorder %s28, 0
      %p81 = por %p79, %p80
      %s83 = sadd.s32 %s82, 1
      %p86 = scmp.eq.s32.totalorder %s22, 1
      %p87 = scmp.ne.s32.totalorder %s82, %s84
      %p88 = scmp.eq.s32.totalorder %s22, 0
      %p89 = por %p87, %p88
      %p90 = scmp.ne.s32.totalorder %s82, %s84
      %p91 = scmp.eq.s32.totalorder %s27, 1
      %p92 = por %p90, %p91
      %p93 = scmp.ne.s32.totalorder %s84, %s85
      %p94 = scmp.eq.s32.totalorder %s27, 0
      %p95 = por %p93, %p94
      %p96 = scmp.ne.s32.totalorder %s84, %s85
      %p97 = scmp.eq.s32.totalorder %s28, 1
      %p98 = por %p96, %p97
      %p100 = scmp.ne.s32.totalorder %s85, %s99
      %p101 = scmp.eq.s32.totalorder %s28, 0
      %p102 = por %p100, %p101
      %s104 = sadd.s32 %s103, 1
      %p107 = scmp.eq.s32.totalorder %s22, 1
      %p108 = scmp.ne.s32.totalorder %s103, %s105
      %p109 = scmp.eq.s32.totalorder %s22, 0
      %p110 = por %p108, %p109
      %p111 = scmp.ne.s32.totalorder %s103, %s105
      %p112 = scmp.eq.s32.totalorder %s27, 1
      %p113 = por %p111, %p112
      %p114 = scmp.ne.s32.totalorder %s105, %s106
      %p115 = scmp.eq.s32.totalorder %s27, 0
      %p116 = por %p114, %p115
      %p117 = scmp.ne.s32.totalorder %s105, %s106
      %p118 = scmp.eq.s32.totalorder %s28, 1
      %p119 = por %p117, %p118
      %p121 = scmp.ne.s32.totalorder %s106, %s120
      %p122 = scmp.eq.s32.totalorder %s28, 0
      %p123 = por %p121, %p122
      %s125 = sadd.s32 %s124, 1
      %p128 = scmp.eq.s32.totalorder %s22, 1
      %p129 = scmp.ne.s32.totalorder %s124, %s126
      %p130 = scmp.eq.s32.totalorder %s22, 0
      %p131 = por %p129, %p130
      %p132 = scmp.ne.s32.totalorder %s124, %s126
      %p133 = scmp.eq.s32.totalorder %s27, 1
      %p134 = por %p132, %p133
      %p135 = scmp.ne.s32.totalorder %s126, %s127
      %p136 = scmp.eq.s32.totalorder %s27, 0
      %p137 = por %p135, %p136
      %p138 = scmp.ne.s32.totalorder %s126, %s127
      %p139 = scmp.eq.s32.totalorder %s28, 1
      %p140 = por %p138, %p139
      %p142 = scmp.ne.s32.totalorder %s127, %s141
      %p143 = scmp.eq.s32.totalorder %s28, 0
      %p144 = por %p142, %p143
      %s146 = sadd.s32 %s145, 1
      %p149 = scmp.eq.s32.totalorder %s22, 1
      %p150 = scmp.ne.s32.totalorder %s145, %s147
      %p151 = scmp.eq.s32.totalorder %s22, 0
      %p152 = por %p150, %p151
      %p153 = scmp.ne.s32.totalorder %s145, %s147
      %p154 = scmp.eq.s32.totalorder %s27, 1
      %p155 = por %p153, %p154
      %p156 = scmp.ne.s32.totalorder %s147, %s148
      %p157 = scmp.eq.s32.totalorder %s27, 0
      %p158 = por %p156, %p157
      %p159 = scmp.ne.s32.totalorder %s147, %s148
      %p160 = scmp.eq.s32.totalorder %s28, 1
      %p161 = por %p159, %p160
      %p163 = scmp.ne.s32.totalorder %s148, %s162
      %p164 = scmp.eq.s32.totalorder %s28, 0
      %p165 = por %p163, %p164
      %s166 = ssub.s32 %s22, %s29
      %p167 = scmp.eq.s32.totalorder %s166, 0
      %s169 = sadd.s32 %s168, 1
      %s170 = scalar_select %p167, %s168, %s169
      %p173 = pneg %p167
      %p174 = scmp.eq.s32.totalorder %s22, 1
      %p175 = por %p173, %p174
      %p176 = scmp.ne.s32.totalorder %s168, %s171
      %p177 = scmp.eq.s32.totalorder %s22, 0
      %p178 = por %p176, %p177
      %p179 = scmp.ne.s32.totalorder %s168, %s171
      %p180 = scmp.eq.s32.totalorder %s27, 1
      %p181 = por %p179, %p180
      %p182 = scmp.ne.s32.totalorder %s171, %s172
      %p183 = scmp.eq.s32.totalorder %s27, 0
      %p184 = por %p182, %p183
      %p185 = scmp.ne.s32.totalorder %s171, %s172
      %p186 = scmp.eq.s32.totalorder %s28, 1
      %p187 = por %p185, %p186
      %p189 = scmp.ne.s32.totalorder %s172, %s188
      %p190 = scmp.eq.s32.totalorder %s28, 0
      %p191 = por %p189, %p190
      %p192 = scmp.le.s32.totalorder 1, %s22
      %p193 = scmp.lt.s32.totalorder %s22, 3
      %p194 = pnand %p192, %p193
      %p195 = pneg %p194
      // Predicated region
      $region9: #{tpu_custom_call.1} parent=5 // pred_check
        _
      $region10: #{tpu_custom_call.1} parent=5 // pred_check_branch
        %197 = sbr.rel (%p194) target = $region12
      $region11: #{tpu_custom_call.1} parent=5 // pred_region
        %s198 = ssub.s32 %s22, 1
        // Predicated region
        $region13: #{tpu_custom_call.1} parent=11 // pred_check
          %p199 = pneg %p95
        $region14: #{tpu_custom_call.1} parent=11 // pred_check_branch
          %201 = sbr.rel (%p199) target = $region16
        $region15: #{tpu_custom_call.1} parent=11 // pred_region
          %s203 = ssub.s32 2048, 2048
          %204 = vsyncadd [#allocation6], %s203
          %s205 = sshll.u32 [#allocation7], 4
          %s206 = int_to_ptr.vmem [resolvable:$true] %s205
          %211 = dma.hbm_to_vmem [thread:$0]  %s2, 2048, %s206, [#allocation6], 128, 128, 8
        $region16: #{tpu_custom_call.1} parent=11 // pred_fallthru
          _
        // Predicated region
        $region17: #{tpu_custom_call.1} parent=11 // pred_check
          %p212 = pneg %p116
        $region18: #{tpu_custom_call.1} parent=11 // pred_check_branch
          %214 = sbr.rel (%p212) target = $region20
        $region19: #{tpu_custom_call.1} parent=11 // pred_region
          _
        $region20: #{tpu_custom_call.1} parent=11 // pred_fallthru
          _
        // Predicated region
        $region21: #{tpu_custom_call.1} parent=11 // pred_check
          %p215 = pneg %p137
        $region22: #{tpu_custom_call.1} parent=11 // pred_check_branch
          %217 = sbr.rel (%p215) target = $region24
        $region23: #{tpu_custom_call.1} parent=11 // pred_region
          %s219 = ssub.s32 2048, 2048
          %220 = vsyncadd [#allocation9], %s219
          %s221 = sshll.u32 [#allocation8], 4
          %s222 = int_to_ptr.vmem [resolvable:$true] %s221
          %227 = dma.hbm_to_vmem [thread:$0]  %s4, 2048, %s222, [#allocation9], 128, 128, 8
        $region24: #{tpu_custom_call.1} parent=11 // pred_fallthru
          _
        // Predicated region
        $region25: #{tpu_custom_call.1} parent=11 // pred_check
          %p228 = pneg %p158
        $region26: #{tpu_custom_call.1} parent=11 // pred_check_branch
          %230 = sbr.rel (%p228) target = $region28
        $region27: #{tpu_custom_call.1} parent=11 // pred_region
          _
        $region28: #{tpu_custom_call.1} parent=11 // pred_fallthru
          _
      $region12: #{tpu_custom_call.1} parent=5 // pred_fallthru
        _
      %p231 = scmp.lt.s32.totalorder %s22, 2
      // Predicated region
      $region29: #{tpu_custom_call.1} parent=5 // pred_check
        %p232 = pneg %p231
      $region30: #{tpu_custom_call.1} parent=5 // pred_check_branch
        %234 = sbr.rel (%p232) target = $region32
      $region31: #{tpu_custom_call.1} parent=5 // pred_region
        // Predicated region
        $region33: #{tpu_custom_call.1} parent=31 // pred_check
          %p235 = pneg %p42
        $region34: #{tpu_custom_call.1} parent=31 // pred_check_branch
          %237 = sbr.rel (%p235) target = $region36
        $region35: #{tpu_custom_call.1} parent=31 // pred_region
          %s238 = sand.u32 %s32, 1
          %s239 = scalar_lea.sflag [#allocation3], %s238
          %s240 = sand.u32 %s32, 1
          %s241 = smul.addr %s240, 128
          %s242 = scalar_lea.vmem [#allocation2], %s241
          %s244 = ssub.s32 2048, 2048
          %245 = vsyncadd %s239, %s244
          %s246 = smul.addr %s22, 16
          %s247 = smul.addr %s246, 128
          %s248 = scalar_lea.hbm %s0, %s247
          %s249 = sshll.u32 %s242, 4
          %s250 = int_to_ptr.vmem [resolvable:$true] %s249
          %255 = dma.hbm_to_vmem [thread:$0]  %s248, 2048, %s250, %s239, 128, 128, 8
        $region36: #{tpu_custom_call.1} parent=31 // pred_fallthru
          _
        // Predicated region
        $region37: #{tpu_custom_call.1} parent=31 // pred_check
          %p256 = pneg %p68
        $region38: #{tpu_custom_call.1} parent=31 // pred_check_branch
          %258 = sbr.rel (%p256) target = $region40
        $region39: #{tpu_custom_call.1} parent=31 // pred_region
          %s259 = sand.u32 %s22, 1
          %s260 = scalar_lea.sflag [#allocation6], %s259
          %s261 = sand.u32 %s58, 1
          %s262 = smul.addr %s261, 128
          %s263 = scalar_lea.vmem [#allocation5], %s262
          %s265 = ssub.s32 2048, 2048
          %266 = vsyncadd %s260, %s265
          %s267 = smul.addr %s22, 16
          %s268 = smul.addr %s267, 128
          %s269 = scalar_lea.hbm %s1, %s268
          %s270 = sshll.u32 %s263, 4
          %s271 = int_to_ptr.vmem [resolvable:$true] %s270
          %276 = dma.hbm_to_vmem [thread:$0]  %s269, 2048, %s271, %s260, 128, 128, 8
        $region40: #{tpu_custom_call.1} parent=31 // pred_fallthru
          _
      $region32: #{tpu_custom_call.1} parent=5 // pred_fallthru
        _
      %p277 = scmp.le.s32.totalorder 1, %s22
      %p278 = scmp.lt.s32.totalorder %s22, 3
      %p279 = pnand %p277, %p278
      %p280 = pneg %p279
      // Predicated region
      $region41: #{tpu_custom_call.1} parent=5 // pred_check
        _
      $region42: #{tpu_custom_call.1} parent=5 // pred_check_branch
        %282 = sbr.rel (%p279) target = $region44
      $region43: #{tpu_custom_call.1} parent=5 // pred_region
        %s283 = ssub.s32 %s22, 1
        %s284 = sand.u32 %s35, 1
        %s285 = scalar_lea.sflag [#allocation3], %s284
        %s286 = sand.u32 %s35, 1
        %s287 = smul.addr %s286, 128
        %s288 = scalar_lea.vmem [#allocation2], %s287
        // Predicated region
        $region45: #{tpu_custom_call.1} parent=43 // pred_check
          %p289 = pneg %p48
        $region46: #{tpu_custom_call.1} parent=43 // pred_check_branch
          %291 = sbr.rel (%p289) target = $region48
        $region47: #{tpu_custom_call.1} parent=43 // pred_region
          %292 = dma.done %s285, 2048
        $region48: #{tpu_custom_call.1} parent=43 // pred_fallthru
          _
        %s293 = sand.u32 %s27, 1
        %s294 = scalar_lea.sflag [#allocation6], %s293
        %s295 = sand.u32 %s61, 1
        %s296 = smul.addr %s295, 128
        %s297 = scalar_lea.vmem [#allocation5], %s296
        // Predicated region
        $region49: #{tpu_custom_call.1} parent=43 // pred_check
          %p298 = pneg %p74
        $region50: #{tpu_custom_call.1} parent=43 // pred_check_branch
          %300 = sbr.rel (%p298) target = $region52
        $region51: #{tpu_custom_call.1} parent=43 // pred_region
          %301 = dma.done %s294, 2048
        $region52: #{tpu_custom_call.1} parent=43 // pred_fallthru
          _
        // Predicated region
        $region53: #{tpu_custom_call.1} parent=43 // pred_check
          %p302 = pneg %p95
        $region54: #{tpu_custom_call.1} parent=43 // pred_check_branch
          %304 = sbr.rel (%p302) target = $region56
        $region55: #{tpu_custom_call.1} parent=43 // pred_region
          %305 = dma.done [#allocation6], 2048
        $region56: #{tpu_custom_call.1} parent=43 // pred_fallthru
          _
        // Predicated region
        $region57: #{tpu_custom_call.1} parent=43 // pred_check
          %p306 = pneg %p137
        $region58: #{tpu_custom_call.1} parent=43 // pred_check_branch
          %308 = sbr.rel (%p306) target = $region60
        $region59: #{tpu_custom_call.1} parent=43 // pred_region
          %309 = dma.done [#allocation9], 2048
        $region60: #{tpu_custom_call.1} parent=43 // pred_fallthru
          _
        %s310 = sand.u32 %s35, 1
        %s311 = scalar_lea.sflag [#allocation3], %s310
        %s312 = sand.u32 %s35, 1
        %s313 = smul.addr %s312, 128
        %s314 = scalar_lea.vmem [#allocation2], %s313
        %p315 = pneg %p48
        %p316 = pneg %p45
        %s317 = sand.u32 %s27, 1
        %s318 = scalar_lea.sflag [#allocation6], %s317
        %s319 = sand.u32 %s61, 1
        %s320 = smul.addr %s319, 128
        %s321 = scalar_lea.vmem [#allocation5], %s320
        %p322 = pneg %p74
        %p323 = pneg %p71
        %p324 = pneg %p95
        %p325 = pneg %p92
        %p326 = pneg %p116
        %p327 = pneg %p113
        %p328 = pneg %p137
        %p329 = pneg %p134
        %p330 = pneg %p158
        %p331 = pneg %p155
        %p332 = pneg %p184
        %p333 = pneg %p181
        %s334 = sand.u32 %s171, 1
        %s335 = scalar_lea.sflag [#allocation4], %s334
        %s336 = sand.u32 %s171, 1
        %s337 = smul.addr %s336, 128
        %s338 = scalar_lea.vmem [#allocation10], %s337
        %v339 = vld [vmem:[%s288] sm:$0xff]
        %v340 = vld [vmem:[%s288 + $0x8] sm:$0xff]
        %v341 = vld [vmem:[%s288 + $0x10] sm:$0xff]
        %v342 = vld [vmem:[%s288 + $0x18] sm:$0xff]
        %v343 = vld [vmem:[%s288 + $0x20] sm:$0xff]
        %v344 = vld [vmem:[%s288 + $0x28] sm:$0xff]
        %v345 = vld [vmem:[%s288 + $0x30] sm:$0xff]
        %v346 = vld [vmem:[%s288 + $0x38] sm:$0xff]
        %v347 = vld [vmem:[%s288 + $0x40] sm:$0xff]
        %v348 = vld [vmem:[%s288 + $0x48] sm:$0xff]
        %v349 = vld [vmem:[%s288 + $0x50] sm:$0xff]
        %v350 = vld [vmem:[%s288 + $0x58] sm:$0xff]
        %v351 = vld [vmem:[%s288 + $0x60] sm:$0xff]
        %v352 = vld [vmem:[%s288 + $0x68] sm:$0xff]
        %v353 = vld [vmem:[%s288 + $0x70] sm:$0xff]
        %v354 = vld [vmem:[%s288 + $0x78] sm:$0xff]
        %v355 = vld [vmem:[%s297] sm:$0xff]
        %v356 = vld [vmem:[%s297 + $0x8] sm:$0xff]
        %v357 = vld [vmem:[%s297 + $0x10] sm:$0xff]
        %v358 = vld [vmem:[%s297 + $0x18] sm:$0xff]
        %v359 = vld [vmem:[%s297 + $0x20] sm:$0xff]
        %v360 = vld [vmem:[%s297 + $0x28] sm:$0xff]
        %v361 = vld [vmem:[%s297 + $0x30] sm:$0xff]
        %v362 = vld [vmem:[%s297 + $0x38] sm:$0xff]
        %v363 = vld [vmem:[%s297 + $0x40] sm:$0xff]
        %v364 = vld [vmem:[%s297 + $0x48] sm:$0xff]
        %v365 = vld [vmem:[%s297 + $0x50] sm:$0xff]
        %v366 = vld [vmem:[%s297 + $0x58] sm:$0xff]
        %v367 = vld [vmem:[%s297 + $0x60] sm:$0xff]
        %v368 = vld [vmem:[%s297 + $0x68] sm:$0xff]
        %v369 = vld [vmem:[%s297 + $0x70] sm:$0xff]
        %v370 = vld [vmem:[%s297 + $0x78] sm:$0xff]
        %v371 = vadd.f32 %v339, %v355
        %v372 = vadd.f32 %v340, %v356
        %v373 = vadd.f32 %v341, %v357
        %v374 = vadd.f32 %v342, %v358
        %v375 = vadd.f32 %v343, %v359
        %v376 = vadd.f32 %v344, %v360
        %v377 = vadd.f32 %v345, %v361
        %v378 = vadd.f32 %v346, %v362
        %v379 = vadd.f32 %v347, %v363
        %v380 = vadd.f32 %v348, %v364
        %v381 = vadd.f32 %v349, %v365
        %v382 = vadd.f32 %v350, %v366
        %v383 = vadd.f32 %v351, %v367
        %v384 = vadd.f32 %v352, %v368
        %v385 = vadd.f32 %v353, %v369
        %v386 = vadd.f32 %v354, %v370
        %v387 = vadd.f32 %v371, %v372
        %v388 = vadd.f32 %v387, %v373
        %v389 = vadd.f32 %v388, %v374
        %v390 = vadd.f32 %v389, %v375
        %v391 = vadd.f32 %v390, %v376
        %v392 = vadd.f32 %v391, %v377
        %v393 = vadd.f32 %v392, %v378
        %v394 = vadd.f32 %v393, %v379
        %v395 = vadd.f32 %v394, %v380
        %v396 = vadd.f32 %v395, %v381
        %v397 = vadd.f32 %v396, %v382
        %v398 = vadd.f32 %v397, %v383
        %v399 = vadd.f32 %v398, %v384
        %v400 = vadd.f32 %v399, %v385
        %v401 = vadd.f32 %v400, %v386
        %v402 = vrot.slane %v401, 4
        %v403 = vadd.f32 %v401, %v402
        %v404 = vrot.slane %v403, 2
        %v405 = vadd.f32 %v403, %v404
        %v406 = vrot.slane %v405, 1
        %v407 = vadd.f32 %v405, %v406
        %v408 = vmul.f32 %v407, 0.00390625
        %v409 = vld [vmem:[#allocation8] sm:$0xff]
        %v410 = vld [vmem:[#allocation8 + $0x8] sm:$0xff]
        %v411 = vld [vmem:[#allocation8 + $0x10] sm:$0xff]
        %v412 = vld [vmem:[#allocation8 + $0x18] sm:$0xff]
        %v413 = vld [vmem:[#allocation8 + $0x20] sm:$0xff]
        %v414 = vld [vmem:[#allocation8 + $0x28] sm:$0xff]
        %v415 = vld [vmem:[#allocation8 + $0x30] sm:$0xff]
        %v416 = vld [vmem:[#allocation8 + $0x38] sm:$0xff]
        %v417 = vld [vmem:[#allocation8 + $0x40] sm:$0xff]
        %v418 = vld [vmem:[#allocation8 + $0x48] sm:$0xff]
        %v419 = vld [vmem:[#allocation8 + $0x50] sm:$0xff]
        %v420 = vld [vmem:[#allocation8 + $0x58] sm:$0xff]
        %v421 = vld [vmem:[#allocation8 + $0x60] sm:$0xff]
        %v422 = vld [vmem:[#allocation8 + $0x68] sm:$0xff]
        %v423 = vld [vmem:[#allocation8 + $0x70] sm:$0xff]
        %v424 = vld [vmem:[#allocation8 + $0x78] sm:$0xff]
        %v425 = vld [vmem:[%s5] sm:$0x1]
        %426 = vmatprep.subr.mxu0 0.0
        %427 = vmatpush1.msra.mxu0 %v409
        %428 = vmatprep.subr.mxu0 0.0
        %429 = vmatpush1.msra.mxu0 %v410
        %430 = vmatprep.subr.mxu0 0.0
        %431 = vmatpush1.msra.mxu0 %v411
        %432 = vmatprep.subr.mxu0 0.0
        %433 = vmatpush1.msra.mxu0 %v412
        %434 = vmatprep.subr.mxu0 0.0
        %435 = vmatpush1.msra.mxu0 %v413
        %436 = vmatprep.subr.mxu0 0.0
        %437 = vmatpush1.msra.mxu0 %v414
        %438 = vmatprep.subr.mxu0 0.0
        %439 = vmatpush1.msra.mxu0 %v415
        %440 = vmatprep.subr.mxu0 0.0
        %441 = vmatpush1.msra.mxu0 %v416
        %442 = vmatprep.subr.mxu0 0.0
        %443 = vmatpush1.msra.mxu0 %v417
        %444 = vmatprep.subr.mxu0 0.0
        %445 = vmatpush1.msra.mxu0 %v418
        %446 = vmatprep.subr.mxu0 0.0
        %447 = vmatpush1.msra.mxu0 %v419
        %448 = vmatprep.subr.mxu0 0.0
        %449 = vmatpush1.msra.mxu0 %v420
        %450 = vmatprep.subr.mxu0 0.0
        %451 = vmatpush1.msra.mxu0 %v421
        %452 = vmatprep.subr.mxu0 0.0
        %453 = vmatpush1.msra.mxu0 %v422
        %454 = vmatprep.subr.mxu0 0.0
        %455 = vmatpush1.msra.mxu0 %v423
        %456 = vmatprep.subr.mxu0 0.0
        %457 = vmatpush1.msra.mxu0 %v424
        %458 = vmatprep.subr.mxu0 0.0
        %459 = vmatpush1.msra.mxu0 0.0
        %460 = vmatprep.subr.mxu0 0.0
        %461 = vmatpush1.msra.mxu0 0.0
        %462 = vmatprep.subr.mxu0 0.0
        %463 = vmatpush1.msra.mxu0 0.0
        %464 = vmatprep.subr.mxu0 0.0
        %465 = vmatpush1.msra.mxu0 0.0
        %466 = vmatprep.subr.mxu0 0.0
        %467 = vmatpush1.msra.mxu0 0.0
        %468 = vmatprep.subr.mxu0 0.0
        %469 = vmatpush1.msra.mxu0 0.0
        %470 = vmatprep.subr.mxu0 0.0
        %471 = vmatpush1.msra.mxu0 0.0
        %472 = vmatprep.subr.mxu0 0.0
        %473 = vmatpush1.msra.mxu0 0.0
        %474 = vmatprep.subr.mxu0 0.0
        %475 = vmatpush1.msra.mxu0 0.0
        %476 = vmatprep.subr.mxu0 0.0
        %477 = vmatpush1.msra.mxu0 0.0
        %478 = vmatprep.subr.mxu0 0.0
        %479 = vmatpush1.msra.mxu0 0.0
        %480 = vmatprep.subr.mxu0 0.0
        %481 = vmatpush1.msra.mxu0 0.0
        %482 = vmatprep.subr.mxu0 0.0
        %483 = vmatpush1.msra.mxu0 0.0
        %484 = vmatprep.subr.mxu0 0.0
        %485 = vmatpush1.msra.mxu0 0.0
        %486 = vmatprep.subr.mxu0 0.0
        %487 = vmatpush1.msra.mxu0 0.0
        %488 = vmatprep.subr.mxu0 0.0
        %489 = vmatpush1.msra.mxu0 0.0
        %490 = vmatprep.mubr.f32.mxu0 0.0
        %491 = vmatmul.mubr.f32.gmra.mrb[0].mxu0 %v408
        %v492 = vpop.f32.mrb[0].mxu0
        %v493 = vadd.f32 %v425, %v492
        %v494 = vpop.f32.mrb[0].mxu0
        %495 = vdwg.mxu0
        %v496 = vmax.f32 %v493, 0.0
        %v497 = vld [vmem:[#allocation7] sm:$0xff]
        %v498 = vld [vmem:[#allocation7 + $0x8] sm:$0xff]
        %v499 = vld [vmem:[#allocation7 + $0x10] sm:$0xff]
        %v500 = vld [vmem:[#allocation7 + $0x18] sm:$0xff]
        %v501 = vld [vmem:[#allocation7 + $0x20] sm:$0xff]
        %v502 = vld [vmem:[#allocation7 + $0x28] sm:$0xff]
        %v503 = vld [vmem:[#allocation7 + $0x30] sm:$0xff]
        %v504 = vld [vmem:[#allocation7 + $0x38] sm:$0xff]
        %v505 = vld [vmem:[#allocation7 + $0x40] sm:$0xff]
        %v506 = vld [vmem:[#allocation7 + $0x48] sm:$0xff]
        %v507 = vld [vmem:[#allocation7 + $0x50] sm:$0xff]
        %v508 = vld [vmem:[#allocation7 + $0x58] sm:$0xff]
        %v509 = vld [vmem:[#allocation7 + $0x60] sm:$0xff]
        %v510 = vld [vmem:[#allocation7 + $0x68] sm:$0xff]
        %v511 = vld [vmem:[#allocation7 + $0x70] sm:$0xff]
        %v512 = vld [vmem:[#allocation7 + $0x78] sm:$0xff]
        %513 = vmatprep.subr.mxu0 0.0
        %514 = vmatpush1.msra.mxu0 %v497
        %515 = vmatprep.subr.mxu0 0.0
        %516 = vmatpush1.msra.mxu0 %v498
        %517 = vmatprep.subr.mxu0 0.0
        %518 = vmatpush1.msra.mxu0 %v499
        %519 = vmatprep.subr.mxu0 0.0
        %520 = vmatpush1.msra.mxu0 %v500
        %521 = vmatprep.subr.mxu0 0.0
        %522 = vmatpush1.msra.mxu0 %v501
        %523 = vmatprep.subr.mxu0 0.0
        %524 = vmatpush1.msra.mxu0 %v502
        %525 = vmatprep.subr.mxu0 0.0
        %526 = vmatpush1.msra.mxu0 %v503
        %527 = vmatprep.subr.mxu0 0.0
        %528 = vmatpush1.msra.mxu0 %v504
        %529 = vmatprep.subr.mxu0 0.0
        %530 = vmatpush1.msra.mxu0 %v505
        %531 = vmatprep.subr.mxu0 0.0
        %532 = vmatpush1.msra.mxu0 %v506
        %533 = vmatprep.subr.mxu0 0.0
        %534 = vmatpush1.msra.mxu0 %v507
        %535 = vmatprep.subr.mxu0 0.0
        %536 = vmatpush1.msra.mxu0 %v508
        %537 = vmatprep.subr.mxu0 0.0
        %538 = vmatpush1.msra.mxu0 %v509
        %539 = vmatprep.subr.mxu0 0.0
        %540 = vmatpush1.msra.mxu0 %v510
        %541 = vmatprep.subr.mxu0 0.0
        %542 = vmatpush1.msra.mxu0 %v511
        %543 = vmatprep.subr.mxu0 0.0
        %544 = vmatpush1.msra.mxu0 %v512
        %545 = vmatprep.subr.mxu0 0.0
        %546 = vmatpush1.msra.mxu0 0.0
        %547 = vmatprep.subr.mxu0 0.0
        %548 = vmatpush1.msra.mxu0 0.0
        %549 = vmatprep.subr.mxu0 0.0
        %550 = vmatpush1.msra.mxu0 0.0
        %551 = vmatprep.subr.mxu0 0.0
        %552 = vmatpush1.msra.mxu0 0.0
        %553 = vmatprep.subr.mxu0 0.0
        %554 = vmatpush1.msra.mxu0 0.0
        %555 = vmatprep.subr.mxu0 0.0
        %556 = vmatpush1.msra.mxu0 0.0
        %557 = vmatprep.subr.mxu0 0.0
        %558 = vmatpush1.msra.mxu0 0.0
        %559 = vmatprep.subr.mxu0 0.0
        %560 = vmatpush1.msra.mxu0 0.0
        %561 = vmatprep.subr.mxu0 0.0
        %562 = vmatpush1.msra.mxu0 0.0
        %563 = vmatprep.subr.mxu0 0.0
        %564 = vmatpush1.msra.mxu0 0.0
        %565 = vmatprep.subr.mxu0 0.0
        %566 = vmatpush1.msra.mxu0 0.0
        %567 = vmatprep.subr.mxu0 0.0
        %568 = vmatpush1.msra.mxu0 0.0
        %569 = vmatprep.subr.mxu0 0.0
        %570 = vmatpush1.msra.mxu0 0.0
        %571 = vmatprep.subr.mxu0 0.0
        %572 = vmatpush1.msra.mxu0 0.0
        %573 = vmatprep.subr.mxu0 0.0
        %574 = vmatpush1.msra.mxu0 0.0
        %575 = vmatprep.subr.mxu0 0.0
        %576 = vmatpush1.msra.mxu0 0.0
        %577 = vmatprep.mubr.f32.mxu0 0.0
        %578 = vmatmul.mubr.f32.gmra.mrb[0].mxu0 %v371
        %v579 = vpop.f32.mrb[0].mxu0
        %v580 = vadd.f32 0.0, %v579
        %v581 = vpop.f32.mrb[0].mxu0
        %582 = vmatprep.mubr.f32.mxu0 0.0
        %583 = vmatmul.mubr.f32.gmra.mrb[0].mxu0 %v372
        %v584 = vpop.f32.mrb[0].mxu0
        %v585 = vadd.f32 0.0, %v584
        %v586 = vpop.f32.mrb[0].mxu0
        %587 = vmatprep.mubr.f32.mxu0 0.0
        %588 = vmatmul.mubr.f32.gmra.mrb[0].mxu0 %v373
        %v589 = vpop.f32.mrb[0].mxu0
        %v590 = vadd.f32 0.0, %v589
        %v591 = vpop.f32.mrb[0].mxu0
        %592 = vmatprep.mubr.f32.mxu0 0.0
        %593 = vmatmul.mubr.f32.gmra.mrb[0].mxu0 %v374
        %v594 = vpop.f32.mrb[0].mxu0
        %v595 = vadd.f32 0.0, %v594
        %v596 = vpop.f32.mrb[0].mxu0
        %597 = vmatprep.mubr.f32.mxu0 0.0
        %598 = vmatmul.mubr.f32.gmra.mrb[0].mxu0 %v375
        %v599 = vpop.f32.mrb[0].mxu0
        %v600 = vadd.f32 0.0, %v599
        %v601 = vpop.f32.mrb[0].mxu0
        %602 = vmatprep.mubr.f32.mxu0 0.0
        %603 = vmatmul.mubr.f32.gmra.mrb[0].mxu0 %v376
        %v604 = vpop.f32.mrb[0].mxu0
        %v605 = vadd.f32 0.0, %v604
        %v606 = vpop.f32.mrb[0].mxu0
        %607 = vmatprep.mubr.f32.mxu0 0.0
        %608 = vmatmul.mubr.f32.gmra.mrb[0].mxu0 %v377
        %v609 = vpop.f32.mrb[0].mxu0
        %v610 = vadd.f32 0.0, %v609
        %v611 = vpop.f32.mrb[0].mxu0
        %612 = vmatprep.mubr.f32.mxu0 0.0
        %613 = vmatmul.mubr.f32.gmra.mrb[0].mxu0 %v378
        %v614 = vpop.f32.mrb[0].mxu0
        %v615 = vadd.f32 0.0, %v614
        %v616 = vpop.f32.mrb[0].mxu0
        %617 = vmatprep.mubr.f32.mxu0 0.0
        %618 = vmatmul.mubr.f32.gmra.mrb[0].mxu0 %v379
        %v619 = vpop.f32.mrb[0].mxu0
        %v620 = vadd.f32 0.0, %v619
        %v621 = vpop.f32.mrb[0].mxu0
        %622 = vmatprep.mubr.f32.mxu0 0.0
        %623 = vmatmul.mubr.f32.gmra.mrb[0].mxu0 %v380
        %v624 = vpop.f32.mrb[0].mxu0
        %v625 = vadd.f32 0.0, %v624
        %v626 = vpop.f32.mrb[0].mxu0
        %627 = vmatprep.mubr.f32.mxu0 0.0
        %628 = vmatmul.mubr.f32.gmra.mrb[0].mxu0 %v381
        %v629 = vpop.f32.mrb[0].mxu0
        %v630 = vadd.f32 0.0, %v629
        %v631 = vpop.f32.mrb[0].mxu0
        %632 = vmatprep.mubr.f32.mxu0 0.0
        %633 = vmatmul.mubr.f32.gmra.mrb[0].mxu0 %v382
        %v634 = vpop.f32.mrb[0].mxu0
        %v635 = vadd.f32 0.0, %v634
        %v636 = vpop.f32.mrb[0].mxu0
        %637 = vmatprep.mubr.f32.mxu0 0.0
        %638 = vmatmul.mubr.f32.gmra.mrb[0].mxu0 %v383
        %v639 = vpop.f32.mrb[0].mxu0
        %v640 = vadd.f32 0.0, %v639
        %v641 = vpop.f32.mrb[0].mxu0
        %642 = vmatprep.mubr.f32.mxu0 0.0
        %643 = vmatmul.mubr.f32.gmra.mrb[0].mxu0 %v384
        %v644 = vpop.f32.mrb[0].mxu0
        %v645 = vadd.f32 0.0, %v644
        %v646 = vpop.f32.mrb[0].mxu0
        %647 = vmatprep.mubr.f32.mxu0 0.0
        %648 = vmatmul.mubr.f32.gmra.mrb[0].mxu0 %v385
        %v649 = vpop.f32.mrb[0].mxu0
        %v650 = vadd.f32 0.0, %v649
        %v651 = vpop.f32.mrb[0].mxu0
        %652 = vmatprep.mubr.f32.mxu0 0.0
        %653 = vmatmul.mubr.f32.gmra.mrb[0].mxu0 %v386
        %v654 = vpop.f32.mrb[0].mxu0
        %v655 = vadd.f32 0.0, %v654
        %v656 = vpop.f32.mrb[0].mxu0
        %657 = vdwg.mxu0
        %v658 = vld [vmem:[%s3] sm:$0x1]
        %v660 = vlaneseq
        %v661 = vshrl.u32 %v660, 7
        %v662 = vsub.s32 0, %v661
        %v663 = vrot.slane %v658, %v662
        %v665 = vadd.f32 %v580, %v663
        %v666 = vadd.f32 %v585, %v663
        %v667 = vadd.f32 %v590, %v663
        %v668 = vadd.f32 %v595, %v663
        %v669 = vadd.f32 %v600, %v663
        %v670 = vadd.f32 %v605, %v663
        %v671 = vadd.f32 %v610, %v663
        %v672 = vadd.f32 %v615, %v663
        %v673 = vadd.f32 %v620, %v663
        %v674 = vadd.f32 %v625, %v663
        %v675 = vadd.f32 %v630, %v663
        %v676 = vadd.f32 %v635, %v663
        %v677 = vadd.f32 %v640, %v663
        %v678 = vadd.f32 %v645, %v663
        %v679 = vadd.f32 %v650, %v663
        %v680 = vadd.f32 %v655, %v663
        %v681 = vmax.f32 %v665, 0.0
        %v682 = vmax.f32 %v666, 0.0
        %v683 = vmax.f32 %v667, 0.0
        %v684 = vmax.f32 %v668, 0.0
        %v685 = vmax.f32 %v669, 0.0
        %v686 = vmax.f32 %v670, 0.0
        %v687 = vmax.f32 %v671, 0.0
        %v688 = vmax.f32 %v672, 0.0
        %v689 = vmax.f32 %v673, 0.0
        %v690 = vmax.f32 %v674, 0.0
        %v691 = vmax.f32 %v675, 0.0
        %v692 = vmax.f32 %v676, 0.0
        %v693 = vmax.f32 %v677, 0.0
        %v694 = vmax.f32 %v678, 0.0
        %v695 = vmax.f32 %v679, 0.0
        %v696 = vmax.f32 %v680, 0.0
        %v697 = vlaneseq
        %v698 = vshrl.u32 %v697, 7
        %v699 = vsub.s32 0, %v698
        %v700 = vrot.slane %v496, %v699
        %v701 = vadd.f32 %v681, %v700
        %v702 = vadd.f32 %v682, %v700
        %v703 = vadd.f32 %v683, %v700
        %v704 = vadd.f32 %v684, %v700
        %v705 = vadd.f32 %v685, %v700
        %v706 = vadd.f32 %v686, %v700
        %v707 = vadd.f32 %v687, %v700
        %v708 = vadd.f32 %v688, %v700
        %v709 = vadd.f32 %v689, %v700
        %v710 = vadd.f32 %v690, %v700
        %v711 = vadd.f32 %v691, %v700
        %v712 = vadd.f32 %v692, %v700
        %v713 = vadd.f32 %v693, %v700
        %v714 = vadd.f32 %v694, %v700
        %v715 = vadd.f32 %v695, %v700
        %v716 = vadd.f32 %v696, %v700
        %v717 = vmul.f32 %v701, 0.5
        %v718 = vmul.f32 %v702, 0.5
        %v719 = vmul.f32 %v703, 0.5
        %v720 = vmul.f32 %v704, 0.5
        %v721 = vmul.f32 %v705, 0.5
        %v722 = vmul.f32 %v706, 0.5
        %v723 = vmul.f32 %v707, 0.5
        %v724 = vmul.f32 %v708, 0.5
        %v725 = vmul.f32 %v709, 0.5
        %v726 = vmul.f32 %v710, 0.5
        %v727 = vmul.f32 %v711, 0.5
        %v728 = vmul.f32 %v712, 0.5
        %v729 = vmul.f32 %v713, 0.5
        %v730 = vmul.f32 %v714, 0.5
        %v731 = vmul.f32 %v715, 0.5
        %v732 = vmul.f32 %v716, 0.5
        %v733 = vtanh.pop %v717
        %v734 = vtanh.pop %v718
        %v735 = vtanh.pop %v719
        %v736 = vtanh.pop %v720
        %v737 = vtanh.pop %v721
        %v738 = vtanh.pop %v722
        %v739 = vtanh.pop %v723
        %v740 = vtanh.pop %v724
        %v741 = vtanh.pop %v725
        %v742 = vtanh.pop %v726
        %v743 = vtanh.pop %v727
        %v744 = vtanh.pop %v728
        %v745 = vtanh.pop %v729
        %v746 = vtanh.pop %v730
        %v747 = vtanh.pop %v731
        %v748 = vtanh.pop %v732
        %v749 = vmul.f32 %v733, 0.5
        %v750 = vmul.f32 %v734, 0.5
        %v751 = vmul.f32 %v735, 0.5
        %v752 = vmul.f32 %v736, 0.5
        %v753 = vmul.f32 %v737, 0.5
        %v754 = vmul.f32 %v738, 0.5
        %v755 = vmul.f32 %v739, 0.5
        %v756 = vmul.f32 %v740, 0.5
        %v757 = vmul.f32 %v741, 0.5
        %v758 = vmul.f32 %v742, 0.5
        %v759 = vmul.f32 %v743, 0.5
        %v760 = vmul.f32 %v744, 0.5
        %v761 = vmul.f32 %v745, 0.5
        %v762 = vmul.f32 %v746, 0.5
        %v763 = vmul.f32 %v747, 0.5
        %v764 = vmul.f32 %v748, 0.5
        %v765 = vadd.f32 %v749, 0.5
        %v766 = vadd.f32 %v750, 0.5
        %v767 = vadd.f32 %v751, 0.5
        %v768 = vadd.f32 %v752, 0.5
        %v769 = vadd.f32 %v753, 0.5
        %v770 = vadd.f32 %v754, 0.5
        %v771 = vadd.f32 %v755, 0.5
        %v772 = vadd.f32 %v756, 0.5
        %v773 = vadd.f32 %v757, 0.5
        %v774 = vadd.f32 %v758, 0.5
        %v775 = vadd.f32 %v759, 0.5
        %v776 = vadd.f32 %v760, 0.5
        %v777 = vadd.f32 %v761, 0.5
        %v778 = vadd.f32 %v762, 0.5
        %v779 = vadd.f32 %v763, 0.5
        %v780 = vadd.f32 %v764, 0.5
        %v781 = vsub.f32 %v339, %v355
        %v782 = vsub.f32 %v340, %v356
        %v783 = vsub.f32 %v341, %v357
        %v784 = vsub.f32 %v342, %v358
        %v785 = vsub.f32 %v343, %v359
        %v786 = vsub.f32 %v344, %v360
        %v787 = vsub.f32 %v345, %v361
        %v788 = vsub.f32 %v346, %v362
        %v789 = vsub.f32 %v347, %v363
        %v790 = vsub.f32 %v348, %v364
        %v791 = vsub.f32 %v349, %v365
        %v792 = vsub.f32 %v350, %v366
        %v793 = vsub.f32 %v351, %v367
        %v794 = vsub.f32 %v352, %v368
        %v795 = vsub.f32 %v353, %v369
        %v796 = vsub.f32 %v354, %v370
        %v797 = vmul.f32 %v781, %v765
        %v798 = vmul.f32 %v782, %v766
        %v799 = vmul.f32 %v783, %v767
        %v800 = vmul.f32 %v784, %v768
        %v801 = vmul.f32 %v785, %v769
        %v802 = vmul.f32 %v786, %v770
        %v803 = vmul.f32 %v787, %v771
        %v804 = vmul.f32 %v788, %v772
        %v805 = vmul.f32 %v789, %v773
        %v806 = vmul.f32 %v790, %v774
        %v807 = vmul.f32 %v791, %v775
        %v808 = vmul.f32 %v792, %v776
        %v809 = vmul.f32 %v793, %v777
        %v810 = vmul.f32 %v794, %v778
        %v811 = vmul.f32 %v795, %v779
        %v812 = vmul.f32 %v796, %v780
        %v813 = vadd.f32 %v355, %v797
        %v814 = vadd.f32 %v356, %v798
        %v815 = vadd.f32 %v357, %v799
        %v816 = vadd.f32 %v358, %v800
        %v817 = vadd.f32 %v359, %v801
        %v818 = vadd.f32 %v360, %v802
        %v819 = vadd.f32 %v361, %v803
        %v820 = vadd.f32 %v362, %v804
        %v821 = vadd.f32 %v363, %v805
        %v822 = vadd.f32 %v364, %v806
        %v823 = vadd.f32 %v365, %v807
        %v824 = vadd.f32 %v366, %v808
        %v825 = vadd.f32 %v367, %v809
        %v826 = vadd.f32 %v368, %v810
        %v827 = vadd.f32 %v369, %v811
        %v828 = vadd.f32 %v370, %v812
        %829 = vst [vmem:[%s338] sm:$0xff] %v813
        %830 = vst [vmem:[%s338 + $0x8] sm:$0xff] %v814
        %831 = vst [vmem:[%s338 + $0x10] sm:$0xff] %v815
        %832 = vst [vmem:[%s338 + $0x18] sm:$0xff] %v816
        %833 = vst [vmem:[%s338 + $0x20] sm:$0xff] %v817
        %834 = vst [vmem:[%s338 + $0x28] sm:$0xff] %v818
        %835 = vst [vmem:[%s338 + $0x30] sm:$0xff] %v819
        %836 = vst [vmem:[%s338 + $0x38] sm:$0xff] %v820
        %837 = vst [vmem:[%s338 + $0x40] sm:$0xff] %v821
        %838 = vst [vmem:[%s338 + $0x48] sm:$0xff] %v822
        %839 = vst [vmem:[%s338 + $0x50] sm:$0xff] %v823
        %840 = vst [vmem:[%s338 + $0x58] sm:$0xff] %v824
        %841 = vst [vmem:[%s338 + $0x60] sm:$0xff] %v825
        %842 = vst [vmem:[%s338 + $0x68] sm:$0xff] %v826
        %843 = vst [vmem:[%s338 + $0x70] sm:$0xff] %v827
        %844 = vst [vmem:[%s338 + $0x78] sm:$0xff] %v828
        %s845 = sand.u32 %s171, 1
        %s846 = scalar_lea.sflag [#allocation4], %s845
        %s847 = sand.u32 %s171, 1
        %s848 = smul.addr %s847, 128
        %s849 = scalar_lea.vmem [#allocation10], %s848
        // Predicated region
        $region61: #{tpu_custom_call.1} parent=43 // pred_check
          %p850 = pneg %p181
        $region62: #{tpu_custom_call.1} parent=43 // pred_check_branch
          %852 = sbr.rel (%p850) target = $region64
        $region63: #{tpu_custom_call.1} parent=43 // pred_region
          %s854 = ssub.s32 2048, 2048
          %855 = vsyncadd %s846, %s854
          %s856 = smul.addr %s27, 16
          %s857 = smul.addr %s856, 128
          %s858 = scalar_lea.hbm %s6, %s857
          %s859 = sshll.u32 %s849, 4
          %s860 = int_to_ptr.vmem [resolvable:$true] %s859
          %865 = dma.vmem_to_hbm [thread:$0]  %s860, 2048, %s858, %s846, 128, 128, 8
        $region64: #{tpu_custom_call.1} parent=43 // pred_fallthru
          _
      $region44: #{tpu_custom_call.1} parent=5 // pred_fallthru
        _
      %p866 = scmp.le.s32.totalorder 2, %s22
      // Predicated region
      $region65: #{tpu_custom_call.1} parent=5 // pred_check
        %p867 = pneg %p866
      $region66: #{tpu_custom_call.1} parent=5 // pred_check_branch
        %869 = sbr.rel (%p867) target = $region68
      $region67: #{tpu_custom_call.1} parent=5 // pred_region
        %s870 = ssub.s32 %s22, 2
        // Predicated region
        $region69: #{tpu_custom_call.1} parent=67 // pred_check
          %p871 = pneg %p187
        $region70: #{tpu_custom_call.1} parent=67 // pred_check_branch
          %873 = sbr.rel (%p871) target = $region72
        $region71: #{tpu_custom_call.1} parent=67 // pred_region
          %s874 = sand.u32 %s172, 1
          %s875 = scalar_lea.sflag [#allocation4], %s874
          %s876 = sand.u32 %s172, 1
          %s877 = smul.addr %s876, 128
          %s878 = scalar_lea.vmem [#allocation10], %s877
          %879 = dma.done %s875, 2048
        $region72: #{tpu_custom_call.1} parent=67 // pred_fallthru
          _
      $region68: #{tpu_custom_call.1} parent=5 // pred_fallthru
        _
    $region6: #{tpu_custom_call.1} parent=1 // loop_footer
      %s26 = sadd.s32 1, %s22
    $region7: #{tpu_custom_call.1} parent=1 // loop_footer_branch
      %21 = sbr.rel target = $region3
    $region8: #{tpu_custom_call.1} parent=1 // loop_exit
      _
    %880 = vsyncpa [#allocation3], 1
    %s881 = scalar_lea.sflag [#allocation3], 1
    %882 = vsyncpa %s881, 1
    %883 = vsyncpa [#allocation6], 1
    %s884 = scalar_lea.sflag [#allocation6], 1
    %885 = vsyncpa %s884, 1
    %886 = vsyncpa [#allocation9], 1
    %887 = vsyncpa [#allocation4], 1
    %s888 = scalar_lea.sflag [#allocation4], 1
    %889 = vsyncpa %s888, 1

</llo_original>
